<compile_context>
chip_gen: v7x
topology: tpu7x:2x2x1
jax: 0.10.0
libtpu: 0.0.40
codegen_flags: <defaults>
</compile_context>

<pallas_src>
import functools

import jax
import jax.numpy as jnp
from jax import lax
from jax.experimental import pallas as pl
from jax.experimental.pallas import tpu as pltpu

SMOOTH = 1e-05
_LANE = 128
_STATIC_UNROLL_CHUNKS = 16               # fully unroll short chunk loops statically
_FALLBACK_VMEM_BYTES = 64 * 1024 * 1024  # v7x per-core physical VMEM (smallest)


def _vmem_capacity_bytes():
    try:
        return int(pltpu.get_tpu_info().vmem_capacity_bytes)
    except Exception:
        return _FALLBACK_VMEM_BYTES


def _sublane_multiple(dtype):
    itemsize = jnp.dtype(dtype).itemsize
    return 8 * max(1, 4 // max(1, itemsize))


def _choose_tb(batch, sublane_mult):
    """Divisor of `batch` respecting the packed-sublane tiling rule (or the
    full batch dim), preferring >=2 blocks so the batch axis can shard across
    v7x's two TensorCores."""
    if batch % sublane_mult != 0:
        return batch                              # full-dim block is always legal
    tb = batch
    if (batch // 2) % sublane_mult == 0 and batch // 2 >= sublane_mult:
        tb = batch // 2
    while tb > 512 and (tb // 2) % sublane_mult == 0 and batch % (tb // 2) == 0:
        tb //= 2
    return tb


def _choose_feature_tiling(n_chunks_total, max_chunks, want_split):
    """Return (chunks_per_tile, n_splits).  chunks_per_tile*128 is the feature
    tile; when want_split, keep an even number of feature tiles so the
    reduction can be halved across two TensorCores."""
    cap = max(1, min(max_chunks, n_chunks_total))
    if want_split and n_chunks_total >= 2:
        for c in range(cap, 0, -1):
            if n_chunks_total % c == 0 and (n_chunks_total // c) % 2 == 0:
                return c, 2
    for c in range(cap, 0, -1):
        if n_chunks_total % c == 0:
            return c, 1
    return 1, 1


def _dice_sums_kernel(x_ref, t_ref, numer_ref, denom_ref,
                      acc_ut, acc_u, acc_t, *, n_valid, n_chunks):
    k = pl.program_id(2)

    @pl.when(k == 0)
    def _():
        acc_ut[...] = jnp.zeros_like(acc_ut)
        acc_u[...] = jnp.zeros_like(acc_u)
        acc_t[...] = jnp.zeros_like(acc_t)

    def process_chunk(col):
        # (tb, 128) chunks streamed straight from the refs: live intermediates
        # stay a handful of vregs regardless of tile size.
        x = x_ref[:, pl.ds(col, _LANE)].astype(jnp.float32)
        t = t_ref[:, pl.ds(col, _LANE)].astype(jnp.float32)
        u = jnp.tanh(0.5 * x)                 # sigmoid(x) = 0.5*u + 0.5 (EUP)
        acc_ut[...] += u * t
        acc_u[...] += u
        acc_t[...] += t

    needs_mask = (n_valid % _LANE) != 0       # static
    n_full = n_chunks - 1 if needs_mask else n_chunks

    if 0 < n_full <= _STATIC_UNROLL_CHUNKS:
        for c in range(n_full):               # static slices, fully unrolled
            process_chunk(c * _LANE)
    elif n_full > 0:
        def body(c, carry):
            process_chunk(pl.multiple_of(c * _LANE, _LANE))
            return carry
        lax.fori_loop(0, n_full, body, 0, unroll=8)

    if needs_mask:
        # Only the globally-last feature tile's final chunk is ragged; for all
        # other tiles this mask is all-true.
        tile_idx = pl.program_id(0) * pl.num_programs(2) + k
        col0 = tile_idx * (n_chunks * _LANE) + (n_chunks - 1) * _LANE
        lane = lax.broadcasted_iota(jnp.int32, acc_u.shape, 1)
        valid = (col0 + lane) < n_valid
        x = x_ref[:, pl.ds((n_chunks - 1) * _LANE, _LANE)].astype(jnp.float32)
        t = t_ref[:, pl.ds((n_chunks - 1) * _LANE, _LANE)].astype(jnp.float32)
        u = jnp.where(valid, jnp.tanh(0.5 * x), 0.0)
        t = jnp.where(valid, t, 0.0)
        acc_ut[...] += u * t
        acc_u[...] += u
        acc_t[...] += t

    @pl.when(k == pl.num_programs(2) - 1)
    def _():
        sum_ut = jnp.sum(acc_ut[...], axis=-1, keepdims=True)   # (tb, 1)
        sum_u = jnp.sum(acc_u[...], axis=-1, keepdims=True)
        sum_t = jnp.sum(acc_t[...], axis=-1, keepdims=True)
        # 2*intersection and the data-dependent part of the denominator; the
        # wrapper adds the constant 0.5*N + smooth and forms dice / loss.
        numer_ref[...] = (sum_ut + sum_t)[None]
        denom_ref[...] = (0.5 * sum_u + sum_t)[None]


def dice_loss(inputs, targets, smooth=SMOOTH):
    assert inputs.ndim == 2 and inputs.shape == targets.shape
    B, N = inputs.shape

    n_padded = ((N + _LANE - 1) // _LANE) * _LANE
    n_chunks_total = n_padded // _LANE

    sublane_mult = max(_sublane_multiple(inputs.dtype),
                       _sublane_multiple(targets.dtype))
    tb = _choose_tb(B, sublane_mult)
    n_batch_blocks = B // tb

    # Generation-aware VMEM sizing: ~96 MiB limit on v5e/v6e (128 MiB
    # physical), ~48 MiB on v7x (64 MiB physical); half feeds the
    # double-buffered input streams.
    vmem_limit = min(_vmem_capacity_bytes() * 3 // 4, 100 * 1024 * 1024)
    input_budget = vmem_limit // 2
    bytes_per_chunk_col = 2 * tb * _LANE * (
        jnp.dtype(inputs.dtype).itemsize + jnp.dtype(targets.dtype).itemsize)
    max_chunks = max(1, input_budget // bytes_per_chunk_col)

    want_split = n_batch_blocks < 2        # v7x: keep both TensorCores busy
    chunks_per_tile, n_splits = _choose_feature_tiling(
        n_chunks_total, max_chunks, want_split)
    tn = chunks_per_tile * _LANE
    k_steps = n_chunks_total // chunks_per_tile // n_splits

    kernel = functools.partial(_dice_sums_kernel,
                               n_valid=N, n_chunks=chunks_per_tile)

    numer, denom = pl.pallas_call(
        kernel,
        out_shape=(jax.ShapeDtypeStruct((n_splits, B, 1), jnp.float32),
                   jax.ShapeDtypeStruct((n_splits, B, 1), jnp.float32)),
        grid_spec=pltpu.PrefetchScalarGridSpec(
            num_scalar_prefetch=0,
            grid=(n_splits, n_batch_blocks, k_steps),   # reduction axis last
            in_specs=[
                pl.BlockSpec((tb, tn), lambda s, b, k: (b, s * k_steps + k)),
                pl.BlockSpec((tb, tn), lambda s, b, k: (b, s * k_steps + k)),
            ],
            out_specs=[
                pl.BlockSpec((1, tb, 1), lambda s, b, k: (s, b, 0)),
                pl.BlockSpec((1, tb, 1), lambda s, b, k: (s, b, 0)),
            ],
            scratch_shapes=[
                pltpu.VMEM((tb, _LANE), jnp.float32),
                pltpu.VMEM((tb, _LANE), jnp.float32),
                pltpu.VMEM((tb, _LANE), jnp.float32),
            ],
        ),
        compiler_params=pltpu.CompilerParams(
            dimension_semantics=("parallel", "parallel", "arbitrary"),
            vmem_limit_bytes=int(vmem_limit),
        ),
    )(inputs, targets)

    two_inter = jnp.sum(numer[:, :, 0], axis=0)          # (B,) = 2*intersection
    denom_data = jnp.sum(denom[:, :, 0], axis=0)          # 0.5*sum(u) + sum(t)
    dice = two_inter / (denom_data + 0.5 * N + smooth)    # = sum(s)+sum(t)+smooth
    return 1.0 - jnp.mean(dice)


def dice_loss_ref(inputs, targets, smooth=SMOOTH):
    s = jax.nn.sigmoid(inputs.astype(jnp.float32))
    inter = jnp.sum(s * targets, axis=1)
    dice = 2.0 * inter / (jnp.sum(s, axis=1) + jnp.sum(targets, axis=1) + smooth)
    return 1.0 - jnp.mean(dice)


if __name__ == "__main__":
    key = jax.random.PRNGKey(0)
    k1, k2 = jax.random.split(key)

    # Aligned case (N % 128 == 0).
    B, N = 8, 256
    logits = jax.random.normal(k1, (B, N), dtype=jnp.float32)
    targets = (jax.random.uniform(k2, (B, N)) > 0.5).astype(jnp.float32)
    out = jax.block_until_ready(dice_loss(logits, targets))
    ref = jax.block_until_ready(dice_loss_ref(logits, targets))
    assert jnp.allclose(out, ref, atol=1e-5, rtol=1e-5), (out, ref)

    # Ragged case (exercises the in-kernel mask for N % 128 != 0).
    Nr = 200
    out_r = jax.block_until_ready(dice_loss(logits[:, :Nr], targets[:, :Nr]))
    ref_r = jax.block_until_ready(dice_loss_ref(logits[:, :Nr], targets[:, :Nr]))
    assert jnp.allclose(out_r, ref_r, atol=1e-5, rtol=1e-5), (out_r, ref_r)

    print("KERNEL_OK")
</pallas_src>

<mosaic_0001>
module attributes {stable_mosaic.version = 11 : i64} {
  func.func @_dice_sums_kernel(%arg0: i32, %arg1: i32, %arg2: i32, %arg3: memref<8x128xf32, #tpu.memory_space<vmem>>, %arg4: memref<8x128xf32, #tpu.memory_space<vmem>>, %arg5: memref<1x8x1xf32, #tpu.memory_space<vmem>>, %arg6: memref<1x8x1xf32, #tpu.memory_space<vmem>>, %arg7: memref<8x128xf32, #tpu.memory_space<vmem>>, %arg8: memref<8x128xf32, #tpu.memory_space<vmem>>, %arg9: memref<8x128xf32, #tpu.memory_space<vmem>>) attributes {dimension_semantics = [#tpu.dimension_semantics<parallel>, #tpu.dimension_semantics<parallel>, #tpu.dimension_semantics<arbitrary>], iteration_bounds = array<i64: 2, 1, 1>, scalar_prefetch = 0 : i64, scratch_operands = 3 : i64, tpu.core_type = #tpu.core_type<tc>, window_params = [{transform_indices = @transform_0, window_bounds = array<i64: 8, 128>}, {transform_indices = @transform_1, window_bounds = array<i64: 8, 128>}, {transform_indices = @transform_2, window_bounds = array<i64: 1, 8, 1>}, {transform_indices = @transform_3, window_bounds = array<i64: 1, 8, 1>}]} {
    %c0_i32 = arith.constant 0 : i32
    %0 = arith.cmpi eq, %arg2, %c0_i32 : i32
    %1 = arith.extui %0 : i1 to i32
    %c0_i32_0 = arith.constant 0 : i32
    %2 = arith.cmpi ne, %1, %c0_i32_0 : i32
    scf.if %2 {
      %cst_18 = arith.constant 0.000000e+00 : f32
      %21 = vector.broadcast %cst_18 : f32 to vector<8x128xf32>
      %c0_19 = arith.constant 0 : index
      %c0_20 = arith.constant 0 : index
      %22 = vector.load %arg7[%c0_19, %c0_20] : memref<8x128xf32, #tpu.memory_space<vmem>>, vector<8x128xf32>
      tpu.vector_store %arg7[%c0_19, %c0_20], %21 {strides = array<i32>} : memref<8x128xf32, #tpu.memory_space<vmem>>, vector<8x128xf32>,
      %cst_21 = arith.constant 0.000000e+00 : f32
      %23 = vector.broadcast %cst_21 : f32 to vector<8x128xf32>
      %c0_22 = arith.constant 0 : index
      %c0_23 = arith.constant 0 : index
      %24 = vector.load %arg8[%c0_22, %c0_23] : memref<8x128xf32, #tpu.memory_space<vmem>>, vector<8x128xf32>
      tpu.vector_store %arg8[%c0_22, %c0_23], %23 {strides = array<i32>} : memref<8x128xf32, #tpu.memory_space<vmem>>, vector<8x128xf32>,
      %cst_24 = arith.constant 0.000000e+00 : f32
      %25 = vector.broadcast %cst_24 : f32 to vector<8x128xf32>
      %c0_25 = arith.constant 0 : index
      %c0_26 = arith.constant 0 : index
      %26 = vector.load %arg9[%c0_25, %c0_26] : memref<8x128xf32, #tpu.memory_space<vmem>>, vector<8x128xf32>
      tpu.vector_store %arg9[%c0_25, %c0_26], %25 {strides = array<i32>} : memref<8x128xf32, #tpu.memory_space<vmem>>, vector<8x128xf32>,
    } else {
    }
    %c0 = arith.constant 0 : index
    %c0_1 = arith.constant 0 : index
    %3 = vector.load %arg3[%c0, %c0_1] : memref<8x128xf32, #tpu.memory_space<vmem>>, vector<8x128xf32>
    %c0_2 = arith.constant 0 : index
    %c0_3 = arith.constant 0 : index
    %4 = vector.load %arg4[%c0_2, %c0_3] : memref<8x128xf32, #tpu.memory_space<vmem>>, vector<8x128xf32>
    %cst = arith.constant 5.000000e-01 : f32
    %5 = vector.broadcast %cst : f32 to vector<8x128xf32>
    %6 = arith.mulf %5, %3 : vector<8x128xf32>
    %7 = math.tanh %6 : vector<8x128xf32>
    %c0_4 = arith.constant 0 : index
    %c0_5 = arith.constant 0 : index
    %8 = vector.load %arg7[%c0_4, %c0_5] : memref<8x128xf32, #tpu.memory_space<vmem>>, vector<8x128xf32>
    %9 = arith.mulf %7, %4 : vector<8x128xf32>
    %10 = arith.addf %8, %9 : vector<8x128xf32>
    %c0_6 = arith.constant 0 : index
    %c0_7 = arith.constant 0 : index
    %11 = vector.load %arg7[%c0_6, %c0_7] : memref<8x128xf32, #tpu.memory_space<vmem>>, vector<8x128xf32>
    tpu.vector_store %arg7[%c0_6, %c0_7], %10 {strides = array<i32>} : memref<8x128xf32, #tpu.memory_space<vmem>>, vector<8x128xf32>,
    %c0_8 = arith.constant 0 : index
    %c0_9 = arith.constant 0 : index
    %12 = vector.load %arg8[%c0_8, %c0_9] : memref<8x128xf32, #tpu.memory_space<vmem>>, vector<8x128xf32>
    %13 = arith.addf %12, %7 : vector<8x128xf32>
    %c0_10 = arith.constant 0 : index
    %c0_11 = arith.constant 0 : index
    %14 = vector.load %arg8[%c0_10, %c0_11] : memref<8x128xf32, #tpu.memory_space<vmem>>, vector<8x128xf32>
    tpu.vector_store %arg8[%c0_10, %c0_11], %13 {strides = array<i32>} : memref<8x128xf32, #tpu.memory_space<vmem>>, vector<8x128xf32>,
    %c0_12 = arith.constant 0 : index
    %c0_13 = arith.constant 0 : index
    %15 = vector.load %arg9[%c0_12, %c0_13] : memref<8x128xf32, #tpu.memory_space<vmem>>, vector<8x128xf32>
    %16 = arith.addf %15, %4 : vector<8x128xf32>
    %c0_14 = arith.constant 0 : index
    %c0_15 = arith.constant 0 : index
    %17 = vector.load %arg9[%c0_14, %c0_15] : memref<8x128xf32, #tpu.memory_space<vmem>>, vector<8x128xf32>
    tpu.vector_store %arg9[%c0_14, %c0_15], %16 {strides = array<i32>} : memref<8x128xf32, #tpu.memory_space<vmem>>, vector<8x128xf32>,
    %c0_i32_16 = arith.constant 0 : i32
    %18 = arith.cmpi eq, %arg2, %c0_i32_16 : i32
    %19 = arith.extui %18 : i1 to i32
    %c0_i32_17 = arith.constant 0 : i32
    %20 = arith.cmpi ne, %19, %c0_i32_17 : i32
    scf.if %20 {
      %c0_18 = arith.constant 0 : index
      %c0_19 = arith.constant 0 : index
      %21 = vector.load %arg7[%c0_18, %c0_19] : memref<8x128xf32, #tpu.memory_space<vmem>>, vector<8x128xf32>
      %cst_20 = arith.constant dense<0.000000e+00> : vector<8xf32>
      %22 = vector.multi_reduction <add>, %21, %cst_20 [1] : vector<8x128xf32> to vector<8xf32>
      %23 = vector.shape_cast %22 : vector<8xf32> to vector<8x1xf32>
      %c0_21 = arith.constant 0 : index
      %c0_22 = arith.constant 0 : index
      %24 = vector.load %arg8[%c0_21, %c0_22] : memref<8x128xf32, #tpu.memory_space<vmem>>, vector<8x128xf32>
      %cst_23 = arith.constant dense<0.000000e+00> : vector<8xf32>
      %25 = vector.multi_reduction <add>, %24, %cst_23 [1] : vector<8x128xf32> to vector<8xf32>
      %26 = vector.shape_cast %25 : vector<8xf32> to vector<8x1xf32>
      %c0_24 = arith.constant 0 : index
      %c0_25 = arith.constant 0 : index
      %27 = vector.load %arg9[%c0_24, %c0_25] : memref<8x128xf32, #tpu.memory_space<vmem>>, vector<8x128xf32>
      %cst_26 = arith.constant dense<0.000000e+00> : vector<8xf32>
      %28 = vector.multi_reduction <add>, %27, %cst_26 [1] : vector<8x128xf32> to vector<8xf32>
      %29 = vector.shape_cast %28 : vector<8xf32> to vector<8x1xf32>
      %30 = arith.addf %23, %29 : vector<8x1xf32>
      %31 = vector.shape_cast %30 : vector<8x1xf32> to vector<1x8x1xf32>
      %c0_27 = arith.constant 0 : index
      %c0_28 = arith.constant 0 : index
      %c0_29 = arith.constant 0 : index
      %32 = vector.load %arg5[%c0_27, %c0_28, %c0_29] : memref<1x8x1xf32, #tpu.memory_space<vmem>>, vector<1x8x1xf32>
      tpu.vector_store %arg5[%c0_27, %c0_28, %c0_29], %31 {strides = array<i32>} : memref<1x8x1xf32, #tpu.memory_space<vmem>>, vector<1x8x1xf32>,
      %cst_30 = arith.constant 5.000000e-01 : f32
      %33 = vector.broadcast %cst_30 : f32 to vector<8x1xf32>
      %34 = arith.mulf %33, %26 : vector<8x1xf32>
      %35 = arith.addf %34, %29 : vector<8x1xf32>
      %36 = vector.shape_cast %35 : vector<8x1xf32> to vector<1x8x1xf32>
      %c0_31 = arith.constant 0 : index
      %c0_32 = arith.constant 0 : index
      %c0_33 = arith.constant 0 : index
      %37 = vector.load %arg6[%c0_31, %c0_32, %c0_33] : memref<1x8x1xf32, #tpu.memory_space<vmem>>, vector<1x8x1xf32>
      tpu.vector_store %arg6[%c0_31, %c0_32, %c0_33], %36 {strides = array<i32>} : memref<1x8x1xf32, #tpu.memory_space<vmem>>, vector<1x8x1xf32>,
    } else {
    }
    return
  }
  func.func @transform_0(%arg0: i32, %arg1: i32, %arg2: i32) -> (i32, i32) {
    %c1_i32 = arith.constant 1 : i32
    %0 = arith.muli %arg0, %c1_i32 : i32
    %1 = arith.addi %0, %arg2 : i32
    %c0_i32 = arith.constant 0 : i32
    return %arg1, %1 : i32, i32
  }
  func.func @transform_1(%arg0: i32, %arg1: i32, %arg2: i32) -> (i32, i32) {
    %c1_i32 = arith.constant 1 : i32
    %0 = arith.muli %arg0, %c1_i32 : i32
    %1 = arith.addi %0, %arg2 : i32
    %c0_i32 = arith.constant 0 : i32
    return %arg1, %1 : i32, i32
  }
  func.func @transform_2(%arg0: i32, %arg1: i32, %arg2: i32) -> (i32, i32, i32) {
    %c0_i32 = arith.constant 0 : i32
    %c0_i32_0 = arith.constant 0 : i32
    return %arg0, %arg1, %c0_i32 : i32, i32, i32
  }
  func.func @transform_3(%arg0: i32, %arg1: i32, %arg2: i32) -> (i32, i32, i32) {
    %c0_i32 = arith.constant 0 : i32
    %c0_i32_0 = arith.constant 0 : i32
    return %arg0, %arg1, %c0_i32 : i32, i32, i32
  }
}

</mosaic_0001>

<llo_original>
// kernel: tpu_custom_call.1
$region0: #{tpu_custom_call.1}
  #allocation0 [shape = 'u32[]', space=smem, size = 0x4, offset = 0x4, fixed_abs, tag = 'smem constant byte address 0x4 - core index']
  #allocation1 [shape = 'u32[144,128]{1,0:T(1,128)}', space=vmem, size = 0x12000, scoped, tag = 'internal scratch']
  #allocation2 [shape = 'f32[8,128]{1,0:T(8,128)}', space=vmem, size = 0x1000, scoped, tag = 'scratch operand']
  #allocation3 [shape = 'f32[8,128]{1,0:T(8,128)}', space=vmem, size = 0x1000, scoped, tag = 'scratch operand']
  #allocation4 [shape = 'f32[8,128]{1,0:T(8,128)}', space=vmem, size = 0x1000, scoped, tag = 'scratch operand']
  %s0 = inlined_call_operand.hbm [shape: f32[8,256], index: 0, kind: input, shape index: {}]
  %s1 = inlined_call_operand.hbm [shape: f32[8,256], index: 1, kind: input, shape index: {}]
  %s2 = inlined_call_operand.vmem [shape: f32[2,8,1], index: 2, kind: output, shape index: {0}]
  %s3 = inlined_call_operand.vmem [shape: f32[2,8,1], index: 3, kind: output, shape index: {1}]
  %4 = xla_tuple %s2, %s3
  %s5 = sld [smem:[#allocation0]]
  $region65: #{tpu_custom_call.1} parent=0
    _
  %s7 = ssub.s32 1, %s5
  %s8 = scalar_select 0, %s7, %s5
  $region1: #{tpu_custom_call.1} parent=0
    #allocation5 [shape = 'u8[8192]{0}', space=vmem, size = 0x2000, scoped, tag = 'input window, operand 0']
    #allocation6 [shape = 's32[2]{0}', space=sflag, size = 0x8, scoped, tag = 'scoped memory for tpu_custom_call.1']
    #allocation7 [shape = 'u8[8192]{0}', space=vmem, size = 0x2000, scoped, tag = 'input window, operand 1']
    #allocation8 [shape = 's32[2]{0}', space=sflag, size = 0x8, scoped, tag = 'scoped memory for tpu_custom_call.1']
    %9 = vsyncpa [#allocation6], 0
    %s10 = scalar_lea.sflag [#allocation6], 1
    %11 = vsyncpa %s10, 0
    %12 = vsyncpa [#allocation8], 0
    %s13 = scalar_lea.sflag [#allocation8], 1
    %14 = vsyncpa %s13, 0
    loop: start=0, step=1, limit=4
    $region2: #{tpu_custom_call.1} parent=1 // loop_pre_header
      _
    $region3: #{tpu_custom_call.1} parent=1 // loop_header
      %s16 = sphi 0, %s20
      %p17 = scmp.ge.s32.totalorder %s16, 4
      %s23 = sphi 0, %s42
      %s24 = sphi 0, %s38
      %s25 = sphi 0, %s34
      %s26 = sphi 0, %s23
      %s27 = sphi 0, %s24
      %s28 = sphi 0, %s25
      %s29 = sphi 0, %s26
      %s30 = sphi 0, %s27
      %s31 = sphi 0, %s28
      %s49 = sphi 0, %s51
      %s52 = sphi 0, %s49
      %s53 = sphi 0, %s52
      %s69 = sphi 0, %s53
      %s79 = sphi 0, %s81
      %s82 = sphi 0, %s79
      %s83 = sphi 0, %s82
      %s99 = sphi 0, %s83
      %s107 = sphi 0, %s109
      %s110 = sphi 0, %s107
      %s111 = sphi 0, %s110
      %s127 = sphi 0, %s111
      %s135 = sphi 0, %s137
      %s138 = sphi 0, %s135
      %s139 = sphi 0, %s138
      %s155 = sphi 0, %s139
    $region4: #{tpu_custom_call.1} parent=1 // loop_header_branch
      %19 = sbr.rel (%p17) target = $region8
    $region5: #{tpu_custom_call.1} parent=1 // loop_body
      %s21 = ssub.s32 %s16, 1
      %s22 = ssub.s32 %s16, 2
      %s32 = sadd.s32 1, %s25
      %p33 = scmp.ge.s32.totalorder %s32, 1
      %s34 = scalar_select %p33, 0, %s32
      %s35 = sadd.s32 1, %s24
      %s36 = scalar_select %p33, %s35, %s24
      %p37 = scmp.ge.s32.totalorder %s36, 1
      %s38 = scalar_select %p37, 0, %s36
      %s39 = sadd.s32 1, %s23
      %s40 = scalar_select %p37, %s39, %s23
      %p41 = scmp.ge.s32.totalorder %s40, 2
      %s42 = scalar_select %p41, 0, %s40
      %s43 = sadd.s32 %s23, %s25
      %s44 = sadd.s32 %s42, %s34
      %s45 = ssub.s32 %s24, %s38
      %s46 = ssub.s32 %s43, %s44
      %s47 = sor.u32 %s45, %s46
      %p48 = scmp.eq.s32.totalorder %s47, 0
      %s50 = sadd.s32 %s49, 1
      %s51 = scalar_select %p48, %s49, %s50
      %p54 = pneg %p48
      %p55 = scmp.eq.s32.totalorder %s16, 1
      %p56 = por %p54, %p55
      %p57 = scmp.ne.s32.totalorder %s49, %s52
      %p58 = scmp.eq.s32.totalorder %s16, 0
      %p59 = por %p57, %p58
      %p60 = scmp.ne.s32.totalorder %s49, %s52
      %p61 = scmp.eq.s32.totalorder %s21, 1
      %p62 = por %p60, %p61
      %p63 = scmp.ne.s32.totalorder %s52, %s53
      %p64 = scmp.eq.s32.totalorder %s21, 0
      %p65 = por %p63, %p64
      %p66 = scmp.ne.s32.totalorder %s52, %s53
      %p67 = scmp.eq.s32.totalorder %s22, 1
      %p68 = por %p66, %p67
      %p70 = scmp.ne.s32.totalorder %s53, %s69
      %p71 = scmp.eq.s32.totalorder %s22, 0
      %p72 = por %p70, %p71
      %s73 = sadd.s32 %s23, %s25
      %s74 = sadd.s32 %s42, %s34
      %s75 = ssub.s32 %s24, %s38
      %s76 = ssub.s32 %s73, %s74
      %s77 = sor.u32 %s75, %s76
      %p78 = scmp.eq.s32.totalorder %s77, 0
      %s80 = sadd.s32 %s79, 1
      %s81 = scalar_select %p78, %s79, %s80
      %p84 = pneg %p78
      %p85 = scmp.eq.s32.totalorder %s16, 1
      %p86 = por %p84, %p85
      %p87 = scmp.ne.s32.totalorder %s79, %s82
      %p88 = scmp.eq.s32.totalorder %s16, 0
      %p89 = por %p87, %p88
      %p90 = scmp.ne.s32.totalorder %s79, %s82
      %p91 = scmp.eq.s32.totalorder %s21, 1
      %p92 = por %p90, %p91
      %p93 = scmp.ne.s32.totalorder %s82, %s83
      %p94 = scmp.eq.s32.totalorder %s21, 0
      %p95 = por %p93, %p94
      %p96 = scmp.ne.s32.totalorder %s82, %s83
      %p97 = scmp.eq.s32.totalorder %s22, 1
      %p98 = por %p96, %p97
      %p100 = scmp.ne.s32.totalorder %s83, %s99
      %p101 = scmp.eq.s32.totalorder %s22, 0
      %p102 = por %p100, %p101
      %s103 = ssub.s32 %s23, %s42
      %s104 = ssub.s32 %s24, %s38
      %s105 = sor.u32 %s103, %s104
      %p106 = scmp.eq.s32.totalorder %s105, 0
      %s108 = sadd.s32 %s107, 1
      %s109 = scalar_select %p106, %s107, %s108
      %p112 = pneg %p106
      %p113 = scmp.eq.s32.totalorder %s16, 1
      %p114 = por %p112, %p113
      %p115 = scmp.ne.s32.totalorder %s107, %s110
      %p116 = scmp.eq.s32.totalorder %s16, 0
      %p117 = por %p115, %p116
      %p118 = scmp.ne.s32.totalorder %s107, %s110
      %p119 = scmp.eq.s32.totalorder %s21, 1
      %p120 = por %p118, %p119
      %p121 = scmp.ne.s32.totalorder %s110, %s111
      %p122 = scmp.eq.s32.totalorder %s21, 0
      %p123 = por %p121, %p122
      %p124 = scmp.ne.s32.totalorder %s110, %s111
      %p125 = scmp.eq.s32.totalorder %s22, 1
      %p126 = por %p124, %p125
      %p128 = scmp.ne.s32.totalorder %s111, %s127
      %p129 = scmp.eq.s32.totalorder %s22, 0
      %p130 = por %p128, %p129
      %s131 = ssub.s32 %s23, %s42
      %s132 = ssub.s32 %s24, %s38
      %s133 = sor.u32 %s131, %s132
      %p134 = scmp.eq.s32.totalorder %s133, 0
      %s136 = sadd.s32 %s135, 1
      %s137 = scalar_select %p134, %s135, %s136
      %p140 = pneg %p134
      %p141 = scmp.eq.s32.totalorder %s16, 1
      %p142 = por %p140, %p141
      %p143 = scmp.ne.s32.totalorder %s135, %s138
      %p144 = scmp.eq.s32.totalorder %s16, 0
      %p145 = por %p143, %p144
      %p146 = scmp.ne.s32.totalorder %s135, %s138
      %p147 = scmp.eq.s32.totalorder %s21, 1
      %p148 = por %p146, %p147
      %p149 = scmp.ne.s32.totalorder %s138, %s139
      %p150 = scmp.eq.s32.totalorder %s21, 0
      %p151 = por %p149, %p150
      %p152 = scmp.ne.s32.totalorder %s138, %s139
      %p153 = scmp.eq.s32.totalorder %s22, 1
      %p154 = por %p152, %p153
      %p156 = scmp.ne.s32.totalorder %s139, %s155
      %p157 = scmp.eq.s32.totalorder %s22, 0
      %p158 = por %p156, %p157
      %p159 = scmp.le.s32.totalorder 1, %s16
      %p160 = scmp.lt.s32.totalorder %s16, 3
      %p161 = pnand %p159, %p160
      %p162 = pneg %p161
      // Predicated region
      $region9: #{tpu_custom_call.1} parent=5 // pred_check
        _
      $region10: #{tpu_custom_call.1} parent=5 // pred_check_branch
        %164 = sbr.rel (%p161) target = $region12
      $region11: #{tpu_custom_call.1} parent=5 // pred_region
        %s165 = ssub.s32 %s16, 1
      $region12: #{tpu_custom_call.1} parent=5 // pred_fallthru
        _
      %p166 = scmp.lt.s32.totalorder %s16, 2
      // Predicated region
      $region13: #{tpu_custom_call.1} parent=5 // pred_check
        %p167 = pneg %p166
      $region14: #{tpu_custom_call.1} parent=5 // pred_check_branch
        %169 = sbr.rel (%p167) target = $region16
      $region15: #{tpu_custom_call.1} parent=5 // pred_region
        // Predicated region
        $region17: #{tpu_custom_call.1} parent=15 // pred_check
          %p170 = pneg %p59
        $region18: #{tpu_custom_call.1} parent=15 // pred_check_branch
          %172 = sbr.rel (%p170) target = $region20
        $region19: #{tpu_custom_call.1} parent=15 // pred_region
          %s173 = sand.u32 %s49, 1
          %s174 = scalar_lea.sflag [#allocation6], %s173
          %s175 = sand.u32 %s49, 1
          %s176 = smul.addr %s175, 8
          %s177 = scalar_lea.vmem [#allocation5], %s176
          %s178 = sadd.s32 %s23, %s25
          %s180 = ssub.s32 128, 128
          %181 = vsyncadd %s174, %s180
          %s182 = smul.addr %s24, 2
          %s183 = sadd.s32 %s178, %s182
          %s184 = smul.addr %s183, 128
          %s185 = scalar_lea.hbm %s0, %s184
          %s187 = sshll.u32 %s177, 4
          %s188 = int_to_ptr.vmem [resolvable:$true] %s187
          %190 = dma.hbm_to_vmem [thread:$0]  %s185, 128, %s188, %s174
        $region20: #{tpu_custom_call.1} parent=15 // pred_fallthru
          _
        // Predicated region
        $region21: #{tpu_custom_call.1} parent=15 // pred_check
          %p191 = pneg %p89
        $region22: #{tpu_custom_call.1} parent=15 // pred_check_branch
          %193 = sbr.rel (%p191) target = $region24
        $region23: #{tpu_custom_call.1} parent=15 // pred_region
          %s194 = sand.u32 %s79, 1
          %s195 = scalar_lea.sflag [#allocation8], %s194
          %s196 = sand.u32 %s79, 1
          %s197 = smul.addr %s196, 8
          %s198 = scalar_lea.vmem [#allocation7], %s197
          %s199 = sadd.s32 %s23, %s25
          %s201 = ssub.s32 128, 128
          %202 = vsyncadd %s195, %s201
          %s203 = smul.addr %s24, 2
          %s204 = sadd.s32 %s199, %s203
          %s205 = smul.addr %s204, 128
          %s206 = scalar_lea.hbm %s1, %s205
          %s208 = sshll.u32 %s198, 4
          %s209 = int_to_ptr.vmem [resolvable:$true] %s208
          %211 = dma.hbm_to_vmem [thread:$0]  %s206, 128, %s209, %s195
        $region24: #{tpu_custom_call.1} parent=15 // pred_fallthru
          _
      $region16: #{tpu_custom_call.1} parent=5 // pred_fallthru
        _
      %p212 = scmp.le.s32.totalorder 1, %s16
      %p213 = scmp.lt.s32.totalorder %s16, 3
      %p214 = pnand %p212, %p213
      %p215 = pneg %p214
      // Predicated region
      $region25: #{tpu_custom_call.1} parent=5 // pred_check
        _
      $region26: #{tpu_custom_call.1} parent=5 // pred_check_branch
        %217 = sbr.rel (%p214) target = $region28
      $region27: #{tpu_custom_call.1} parent=5 // pred_region
        %s218 = ssub.s32 %s16, 1
        %s219 = sand.u32 %s52, 1
        %s220 = scalar_lea.sflag [#allocation6], %s219
        %s221 = sand.u32 %s52, 1
        %s222 = smul.addr %s221, 8
        %s223 = scalar_lea.vmem [#allocation5], %s222
        // Predicated region
        $region29: #{tpu_custom_call.1} parent=27 // pred_check
          %p224 = pneg %p65
        $region30: #{tpu_custom_call.1} parent=27 // pred_check_branch
          %226 = sbr.rel (%p224) target = $region32
        $region31: #{tpu_custom_call.1} parent=27 // pred_region
          %227 = dma.done %s220, 128
        $region32: #{tpu_custom_call.1} parent=27 // pred_fallthru
          _
        %s228 = sand.u32 %s82, 1
        %s229 = scalar_lea.sflag [#allocation8], %s228
        %s230 = sand.u32 %s82, 1
        %s231 = smul.addr %s230, 8
        %s232 = scalar_lea.vmem [#allocation7], %s231
        // Predicated region
        $region33: #{tpu_custom_call.1} parent=27 // pred_check
          %p233 = pneg %p95
        $region34: #{tpu_custom_call.1} parent=27 // pred_check_branch
          %235 = sbr.rel (%p233) target = $region36
        $region35: #{tpu_custom_call.1} parent=27 // pred_region
          %236 = dma.done %s229, 128
        $region36: #{tpu_custom_call.1} parent=27 // pred_fallthru
          _
        %s237 = sand.u32 %s52, 1
        %s238 = scalar_lea.sflag [#allocation6], %s237
        %s239 = sand.u32 %s52, 1
        %s240 = smul.addr %s239, 8
        %s241 = scalar_lea.vmem [#allocation5], %s240
        %p242 = pneg %p65
        %p243 = pneg %p62
        %s244 = sand.u32 %s82, 1
        %s245 = scalar_lea.sflag [#allocation8], %s244
        %s246 = sand.u32 %s82, 1
        %s247 = smul.addr %s246, 8
        %s248 = scalar_lea.vmem [#allocation7], %s247
        %p249 = pneg %p95
        %p250 = pneg %p92
        %p251 = pneg %p123
        %p252 = pneg %p120
        %p253 = scmp.lt.s32.totalorder %s26, 1
        %s254 = scalar_select %p253, %s26, 1
        %p255 = scmp.lt.s32.totalorder %s27, 0
        %s256 = scalar_select %p255, %s27, 0
        %s257 = sadd.s32 %s256, %s254
        %s258 = smul.addr %s257, 8
        %s259 = scalar_lea.vmem %s2, %s258
        %p260 = pneg %p151
        %p261 = pneg %p148
        %p262 = scmp.lt.s32.totalorder %s26, 1
        %s263 = scalar_select %p262, %s26, 1
        %p264 = scmp.lt.s32.totalorder %s27, 0
        %s265 = scalar_select %p264, %s27, 0
        %s266 = sadd.s32 %s265, %s263
        %s267 = smul.addr %s266, 8
        %s268 = scalar_lea.vmem %s3, %s267
        %s269 = sadd.s32 %s26, %s28
        %s270 = sadd.s32 %s26, %s28
        %p271 = scmp.lt.s32.totalorder %s26, 1
        %s272 = scalar_select %p271, %s26, 1
        %p273 = scmp.lt.s32.totalorder %s27, 0
        %s274 = scalar_select %p273, %s27, 0
        %s275 = sadd.s32 %s274, %s272
        %s276 = smul.addr %s275, 8
        %s277 = scalar_lea.vmem %s2, %s276
        %p278 = scmp.lt.s32.totalorder %s26, 1
        %s279 = scalar_select %p278, %s26, 1
        %p280 = scmp.lt.s32.totalorder %s27, 0
        %s281 = scalar_select %p280, %s27, 0
        %s282 = sadd.s32 %s281, %s279
        %s283 = smul.addr %s282, 8
        %s284 = scalar_lea.vmem %s3, %s283
        %p285 = scmp.eq.s32.totalorder %s28, 0
        // Predicated region
        $region37: #{tpu_custom_call.1} parent=27 // pred_check
          %p286 = pneg %p285
        $region38: #{tpu_custom_call.1} parent=27 // pred_check_branch
          %288 = sbr.rel (%p286) target = $region40
        $region39: #{tpu_custom_call.1} parent=27 // pred_region
          %289 = vst [vmem:[#allocation2] sm:$0xff] 0.0
          %290 = vst [vmem:[#allocation3] sm:$0xff] 0.0
          %291 = vst [vmem:[#allocation4] sm:$0xff] 0.0
        $region40: #{tpu_custom_call.1} parent=27 // pred_fallthru
          _
        %v292 = vld [vmem:[%s223] sm:$0xff]
        %v293 = vld [vmem:[%s232] sm:$0xff]
        %v294 = vmul.f32 %v292, 0.5
        %v295 = vtanh.pop %v294
        %v296 = vld [vmem:[#allocation2] sm:$0xff]
        %v297 = vmul.f32 %v295, %v293
        %v298 = vadd.f32 %v296, %v297
        %299 = vst [vmem:[#allocation2] sm:$0xff] %v298
        %v300 = vld [vmem:[#allocation3] sm:$0xff]
        %v301 = vadd.f32 %v300, %v295
        %302 = vst [vmem:[#allocation3] sm:$0xff] %v301
        %v303 = vld [vmem:[#allocation4] sm:$0xff]
        %v304 = vadd.f32 %v303, %v293
        %305 = vst [vmem:[#allocation4] sm:$0xff] %v304
        // Predicated region
        $region41: #{tpu_custom_call.1} parent=27 // pred_check
          %p306 = pneg %p285
        $region42: #{tpu_custom_call.1} parent=27 // pred_check_branch
          %308 = sbr.rel (%p306) target = $region44
        $region43: #{tpu_custom_call.1} parent=27 // pred_region
          %v309 = vld [vmem:[#allocation2] sm:$0xff]
          %310 = vadd.xlane.f32.xlu0 %v309
          %v311 = vpop.xlane.xlu0 %310
          %v312 = vld [vmem:[#allocation3] sm:$0xff]
          %313 = vadd.xlane.f32.xlu0 %v312
          %v314 = vpop.xlane.xlu0 %313
          %v315 = vld [vmem:[#allocation4] sm:$0xff]
          %316 = vadd.xlane.f32.xlu0 %v315
          %v317 = vpop.xlane.xlu0 %316
          %v318 = vadd.f32 %v311, %v317
          %vm319 = vcmask 7168
          %320 = vst.msk [vmem:[%s277] sm:$0xff] %vm319, %v318
          %v321 = vmul.f32 %v314, 0.5
          %v322 = vadd.f32 %v321, %v317
          %323 = vst.msk [vmem:[%s284] sm:$0xff] %vm319, %v322
        $region44: #{tpu_custom_call.1} parent=27 // pred_fallthru
          _
        %p324 = scmp.lt.s32.totalorder %s26, 1
        %s325 = scalar_select %p324, %s26, 1
        %p326 = scmp.lt.s32.totalorder %s27, 0
        %s327 = scalar_select %p326, %s27, 0
        %s328 = sadd.s32 %s327, %s325
        %s329 = smul.addr %s328, 8
        %s330 = scalar_lea.vmem %s2, %s329
        %p331 = scmp.lt.s32.totalorder %s26, 1
        %s332 = scalar_select %p331, %s26, 1
        %p333 = scmp.lt.s32.totalorder %s27, 0
        %s334 = scalar_select %p333, %s27, 0
        %s335 = sadd.s32 %s334, %s332
        %s336 = smul.addr %s335, 8
        %s337 = scalar_lea.vmem %s3, %s336
        // Predicated region
        $region45: #{tpu_custom_call.1} parent=27 // pred_check
          %p338 = pneg %p120
        $region46: #{tpu_custom_call.1} parent=27 // pred_check_branch
          %340 = sbr.rel (%p338) target = $region48
        $region47: #{tpu_custom_call.1} parent=27 // pred_region
          _
        $region48: #{tpu_custom_call.1} parent=27 // pred_fallthru
          _
        // Predicated region
        $region49: #{tpu_custom_call.1} parent=27 // pred_check
          %p341 = pneg %p148
        $region50: #{tpu_custom_call.1} parent=27 // pred_check_branch
          %343 = sbr.rel (%p341) target = $region52
        $region51: #{tpu_custom_call.1} parent=27 // pred_region
          _
        $region52: #{tpu_custom_call.1} parent=27 // pred_fallthru
          _
      $region28: #{tpu_custom_call.1} parent=5 // pred_fallthru
        _
      %p344 = scmp.le.s32.totalorder 2, %s16
      // Predicated region
      $region53: #{tpu_custom_call.1} parent=5 // pred_check
        %p345 = pneg %p344
      $region54: #{tpu_custom_call.1} parent=5 // pred_check_branch
        %347 = sbr.rel (%p345) target = $region56
      $region55: #{tpu_custom_call.1} parent=5 // pred_region
        %s348 = ssub.s32 %s16, 2
        // Predicated region
        $region57: #{tpu_custom_call.1} parent=55 // pred_check
          %p349 = pneg %p126
        $region58: #{tpu_custom_call.1} parent=55 // pred_check_branch
          %351 = sbr.rel (%p349) target = $region60
        $region59: #{tpu_custom_call.1} parent=55 // pred_region
          %p352 = scmp.lt.s32.totalorder %s29, 1
          %s353 = scalar_select %p352, %s29, 1
          %p354 = scmp.lt.s32.totalorder %s30, 0
          %s355 = scalar_select %p354, %s30, 0
          %s356 = sadd.s32 %s355, %s353
          %s357 = smul.addr %s356, 8
          %s358 = scalar_lea.vmem %s2, %s357
        $region60: #{tpu_custom_call.1} parent=55 // pred_fallthru
          _
        // Predicated region
        $region61: #{tpu_custom_call.1} parent=55 // pred_check
          %p359 = pneg %p154
        $region62: #{tpu_custom_call.1} parent=55 // pred_check_branch
          %361 = sbr.rel (%p359) target = $region64
        $region63: #{tpu_custom_call.1} parent=55 // pred_region
          %p362 = scmp.lt.s32.totalorder %s29, 1
          %s363 = scalar_select %p362, %s29, 1
          %p364 = scmp.lt.s32.totalorder %s30, 0
          %s365 = scalar_select %p364, %s30, 0
          %s366 = sadd.s32 %s365, %s363
          %s367 = smul.addr %s366, 8
          %s368 = scalar_lea.vmem %s3, %s367
        $region64: #{tpu_custom_call.1} parent=55 // pred_fallthru
          _
      $region56: #{tpu_custom_call.1} parent=5 // pred_fallthru
        _
    $region6: #{tpu_custom_call.1} parent=1 // loop_footer
      %s20 = sadd.s32 1, %s16
    $region7: #{tpu_custom_call.1} parent=1 // loop_footer_branch
      %15 = sbr.rel target = $region3
    $region8: #{tpu_custom_call.1} parent=1 // loop_exit
      _
    %369 = vsyncpa [#allocation6], 1
    %s370 = scalar_lea.sflag [#allocation6], 1
    %371 = vsyncpa %s370, 1
    %372 = vsyncpa [#allocation8], 1
    %s373 = scalar_lea.sflag [#allocation8], 1
    %374 = vsyncpa %s373, 1

</llo_original>
